<compile_context>
chip_gen: v5e
topology: v5e:2x2
jax: 0.10.0
libtpu: 0.0.40
codegen_flags: <defaults>
</compile_context>

<pallas_src>
import functools

import jax
import jax.numpy as jnp
from jax import lax
from jax.experimental import pallas as pl
from jax.experimental.pallas import tpu as pltpu


# ----------------------------------------------------------------------------
# Kernel: one grid step == (batch item b, query tile t), all heads.
# ----------------------------------------------------------------------------
def _fused_attention_kernel(xq_ref, xf_ref, wq_ref, bq_ref, wk_ref, bk_ref,
                            wv_ref, bv_ref, wp_ref, bp_ref, o_ref,
                            k_scr, v_scr, o_scr, *, num_heads, mxu_dtype):
    tq = xq_ref.shape[1]
    c = xq_ref.shape[2]

    # --- Stage K / V for this batch item once (first q-tile only) ----------
    @pl.when(pl.program_id(1) == 0)
    def _():
        xf = xf_ref[0]                                            # (N, C) mxu_dtype

        def fill(h, carry):
            k_h = jnp.dot(xf, wk_ref[h],
                          preferred_element_type=jnp.float32) + bk_ref[h]
            v_h = jnp.dot(xf, wv_ref[h],
                          preferred_element_type=jnp.float32) + bv_ref[h]
            k_scr[h] = k_h.astype(mxu_dtype)                      # (N, dh)
            v_scr[h] = v_h.astype(mxu_dtype)                      # (N, dh)
            return carry

        lax.fori_loop(0, num_heads, fill, 0)

    xq = xq_ref[0]                                                # (TQ, C) mxu_dtype

    # --- Per-head attention for this q-tile (fori_loop bounds live set) ----
    def head(h, carry):
        # softmax scale is already folded into wq / bq (param prep).
        q_h = jnp.dot(xq, wq_ref[h],
                      preferred_element_type=jnp.float32) + bq_ref[h]   # (TQ, dh)
        # scores: contract on dh; K consumed in its natural (N, dh) layout.
        s = lax.dot_general(q_h.astype(mxu_dtype), k_scr[h],
                            dimension_numbers=(((1,), (1,)), ((), ())),
                            preferred_element_type=jnp.float32)         # (TQ, N)
        m = jnp.max(s, axis=-1, keepdims=True)
        p = jnp.exp(s - m)                                        # f32 softmax
        denom = jnp.sum(p, axis=-1, keepdims=True)
        p = p * pl.reciprocal(denom, approx=True)                 # EUP divide
        o_h = jnp.dot(p.astype(mxu_dtype), v_scr[h],
                      preferred_element_type=jnp.float32)         # (TQ, dh)
        o_scr[h] = o_h
        return carry

    lax.fori_loop(0, num_heads, head, 0)

    # --- Gather heads into a lane-dense (TQ, C) slab, project with K = C ---
    o = jnp.concatenate([o_scr[h] for h in range(num_heads)], axis=-1)
    y = jnp.dot(o.astype(mxu_dtype), wp_ref[...],
                preferred_element_type=jnp.float32) + bp_ref[...]
    o_ref[0] = y.astype(o_ref.dtype)                              # full-lane store


# ----------------------------------------------------------------------------
# One-time parameter preparation (host / XLA side, NOT in the kernel hot loop):
# per-head blocking of wq/wkv, softmax scale folded into wq/bq, MXU dtype cast.
# ----------------------------------------------------------------------------
def prepare_params(params, num_heads, *, mxu_dtype=jnp.bfloat16):
    c = params["wq"].shape[0]
    dh = c // num_heads
    scale = dh ** (-0.5)

    def per_head(w):                                # (C, H*dh) -> (H, C, dh)
        return jnp.transpose(w.reshape(c, num_heads, dh), (1, 0, 2))

    def per_head_bias(b):                           # (1, H*dh) -> (H, 1, dh)
        return jnp.transpose(b.reshape(1, num_heads, dh), (1, 0, 2))

    wkv, bkv = params["wkv"], params["bkv"]
    return {
        "wq":    per_head(params["wq"] * scale).astype(mxu_dtype),
        "bq":    per_head_bias(params["bq"] * scale).astype(jnp.float32),
        "wk":    per_head(wkv[:, :c]).astype(mxu_dtype),
        "bk":    per_head_bias(bkv[:, :c]).astype(jnp.float32),
        "wv":    per_head(wkv[:, c:]).astype(mxu_dtype),
        "bv":    per_head_bias(bkv[:, c:]).astype(jnp.float32),
        "wproj": params["wproj"].astype(mxu_dtype),
        "bproj": params["bproj"].astype(jnp.float32),
    }


def attention_forward(x, params, num_heads, *, mxu_dtype=jnp.bfloat16, tq=None):
    """x: (B, N, C).  `params` may be raw ({'wq','bq','wkv','bkv','wproj','bproj'},
    weights stored as (in, out)) or already run through prepare_params."""
    B, N, C = x.shape
    dh = C // num_heads
    out_dtype = x.dtype

    if tq is None:
        tq = 128 if (N % 128 == 0) else N          # re-derive per shape
    assert N % tq == 0, "q-tile must divide N"     # TODO(synk): mask ragged tile
    nt = N // tq

    p = params if "wk" in params else prepare_params(
        params, num_heads, mxu_dtype=mxu_dtype)
    x_m = x.astype(mxu_dtype)

    # Rough VMEM budget (bytes) with 2x headroom, clamped to [16 MiB, 64 MiB].
    itm = jnp.dtype(mxu_dtype).itemsize
    est = (2 * (tq * C + N * C) * itm            # x_q / x_full blocks (dbl-buffered)
           + 2 * 4 * C * C * itm                 # wq+wk+wv+wproj (worst-case dbl-buf)
           + 2 * num_heads * N * dh * itm        # K / V scratch
           + num_heads * tq * dh * 4             # per-head output scratch (f32)
           + 2 * tq * N * 4                      # score tile + its exp (f32)
           + 4 * tq * C * 4)                     # proj temp + output block
    vmem_limit = int(min(max(2 * est, 16 * 2**20), 64 * 2**20))

    kernel = functools.partial(_fused_attention_kernel,
                               num_heads=num_heads, mxu_dtype=mxu_dtype)

    act_q_spec = pl.BlockSpec((1, tq, C), lambda b, t: (b, t, 0))
    # Full-N view of x: block index constant along t => DMA'd once per batch item.
    act_full_spec = pl.BlockSpec((1, N, C), lambda b, t: (b, 0, 0))
    const3 = lambda b, t: (0, 0, 0)
    const2 = lambda b, t: (0, 0)

    return pl.pallas_call(
        kernel,
        out_shape=jax.ShapeDtypeStruct((B, N, C), out_dtype),
        grid=(B, nt),
        in_specs=[
            act_q_spec,                                          # x (q-tile view)
            act_full_spec,                                       # x (full-N view)
            pl.BlockSpec((num_heads, C, dh), const3),            # wq (scale folded)
            pl.BlockSpec((num_heads, 1, dh), const3),            # bq (scale folded)
            pl.BlockSpec((num_heads, C, dh), const3),            # wk
            pl.BlockSpec((num_heads, 1, dh), const3),            # bk
            pl.BlockSpec((num_heads, C, dh), const3),            # wv
            pl.BlockSpec((num_heads, 1, dh), const3),            # bv
            pl.BlockSpec((C, C), const2),                        # wproj
            pl.BlockSpec((1, C), const2),                        # bproj
        ],
        out_specs=act_q_spec,
        scratch_shapes=[
            pltpu.VMEM((num_heads, N, dh), mxu_dtype),           # K scratch
            pltpu.VMEM((num_heads, N, dh), mxu_dtype),           # V scratch
            pltpu.VMEM((num_heads, tq, dh), jnp.float32),        # per-head out
        ],
        compiler_params=pltpu.CompilerParams(
            dimension_semantics=("parallel", "arbitrary"),
            vmem_limit_bytes=vmem_limit),
    )(x_m, x_m, p["wq"], p["bq"], p["wk"], p["bk"], p["wv"], p["bv"],
      p["wproj"], p["bproj"])


# ----------------------------------------------------------------------------
# Pure-JAX reference for correctness checking.
# ----------------------------------------------------------------------------
def attention_reference(x, params, num_heads):
    B, N, C = x.shape
    head_dim = C // num_heads
    scale = head_dim ** (-0.5)
    q = (x.reshape(B * N, C) @ params["wq"] + params["bq"]).reshape(
        B, N, num_heads, head_dim).transpose(0, 2, 1, 3)
    kv = (x.reshape(B * N, C) @ params["wkv"] + params["bkv"]).reshape(
        B, N, 2, num_heads, head_dim).transpose(2, 0, 3, 1, 4)
    k, v = kv[0], kv[1]
    attn = jnp.einsum("bhqd,bhkd->bhqk", q, k) * scale
    attn = jax.nn.softmax(attn, axis=-1)
    o = jnp.einsum("bhqk,bhkd->bhqd", attn, v)
    o = o.transpose(0, 2, 1, 3).reshape(B * N, C)
    y = o @ params["wproj"] + params["bproj"]
    return y.reshape(B, N, C)


if __name__ == "__main__":
    # Small shapes consistent with the module: dim=32, num_heads=4, seq=16.
    B, N, C = 2, 16, 32
    num_heads = 4

    key = jax.random.PRNGKey(0)
    kx, kq, kkv, kp, kpb = jax.random.split(key, 5)

    x = jax.random.normal(kx, (B, N, C), dtype=jnp.float32)

    params = {
        # weights stored as (in_features, out_features)
        "wq":    0.02 * jax.random.normal(kq,  (C, C),     dtype=jnp.float32),
        "bq":    jnp.zeros((1, C), jnp.float32),            # qkv_bias=False
        "wkv":   0.02 * jax.random.normal(kkv, (C, 2 * C), dtype=jnp.float32),
        "bkv":   jnp.zeros((1, 2 * C), jnp.float32),        # qkv_bias=False
        "wproj": 0.02 * jax.random.normal(kp,  (C, C),     dtype=jnp.float32),
        "bproj": 0.01 * jax.random.normal(kpb, (1, C),     dtype=jnp.float32),
    }

    ref = attention_reference(x, params, num_heads)

    # f32 MXU path with tq=8: exercises the q-tile grid axis and the K/V
    # scratch reuse across tiles; tight tolerance (approx reciprocal only).
    prep_f32 = prepare_params(params, num_heads, mxu_dtype=jnp.float32)
    out_f32 = jax.block_until_ready(
        attention_forward(x, prep_f32, num_heads, mxu_dtype=jnp.float32, tq=8))
    assert out_f32.shape == (B, N, C)
    assert jnp.allclose(out_f32, ref, atol=1e-3, rtol=1e-3), "f32 mismatch"

    # Default bf16 MXU-operand path (f32 accumulation + f32 softmax kept).
    prep_bf16 = prepare_params(params, num_heads, mxu_dtype=jnp.bfloat16)
    out_bf16 = jax.block_until_ready(
        attention_forward(x, prep_bf16, num_heads, mxu_dtype=jnp.bfloat16, tq=8))
    assert out_bf16.shape == (B, N, C)
    assert jnp.allclose(out_bf16, ref, atol=5e-2, rtol=5e-2), "bf16 mismatch"

    print("KERNEL_OK")
</pallas_src>

<mosaic_0001>
module attributes {stable_mosaic.version = 11 : i64} {
  func.func @_fused_attention_kernel(%arg0: i32, %arg1: i32, %arg2: memref<1x8x32xf32, #tpu.memory_space<vmem>>, %arg3: memref<1x16x32xf32, #tpu.memory_space<vmem>>, %arg4: memref<4x32x8xf32, #tpu.memory_space<vmem>>, %arg5: memref<4x1x8xf32, #tpu.memory_space<vmem>>, %arg6: memref<4x32x8xf32, #tpu.memory_space<vmem>>, %arg7: memref<4x1x8xf32, #tpu.memory_space<vmem>>, %arg8: memref<4x32x8xf32, #tpu.memory_space<vmem>>, %arg9: memref<4x1x8xf32, #tpu.memory_space<vmem>>, %arg10: memref<32x32xf32, #tpu.memory_space<vmem>>, %arg11: memref<1x32xf32, #tpu.memory_space<vmem>>, %arg12: memref<1x8x32xf32, #tpu.memory_space<vmem>>, %arg13: memref<4x16x8xf32, #tpu.memory_space<vmem>>, %arg14: memref<4x16x8xf32, #tpu.memory_space<vmem>>, %arg15: memref<4x8x8xf32, #tpu.memory_space<vmem>>) attributes {dimension_semantics = [#tpu.dimension_semantics<parallel>, #tpu.dimension_semantics<arbitrary>], iteration_bounds = array<i64: 2, 2>, scalar_prefetch = 0 : i64, scratch_operands = 3 : i64, tpu.core_type = #tpu.core_type<tc>, window_params = [{transform_indices = @transform_0, window_bounds = array<i64: 1, 8, 32>}, {transform_indices = @transform_1, window_bounds = array<i64: 1, 16, 32>}, {pipeline_mode = #tpu.pipeline_mode<synchronous>, transform_indices = @transform_2, window_bounds = array<i64: 4, 32, 8>}, {pipeline_mode = #tpu.pipeline_mode<synchronous>, transform_indices = @transform_3, window_bounds = array<i64: 4, 1, 8>}, {pipeline_mode = #tpu.pipeline_mode<synchronous>, transform_indices = @transform_4, window_bounds = array<i64: 4, 32, 8>}, {pipeline_mode = #tpu.pipeline_mode<synchronous>, transform_indices = @transform_5, window_bounds = array<i64: 4, 1, 8>}, {pipeline_mode = #tpu.pipeline_mode<synchronous>, transform_indices = @transform_6, window_bounds = array<i64: 4, 32, 8>}, {pipeline_mode = #tpu.pipeline_mode<synchronous>, transform_indices = @transform_7, window_bounds = array<i64: 4, 1, 8>}, {pipeline_mode = #tpu.pipeline_mode<synchronous>, transform_indices = @transform_8, window_bounds = array<i64: 32, 32>}, {pipeline_mode = #tpu.pipeline_mode<synchronous>, transform_indices = @transform_9, window_bounds = array<i64: 1, 32>}, {transform_indices = @transform_10, window_bounds = array<i64: 1, 8, 32>}]} {
    %c0_i32 = arith.constant 0 : i32
    %0 = arith.cmpi eq, %arg1, %c0_i32 : i32
    %1 = arith.extui %0 : i1 to i32
    %c0_i32_0 = arith.constant 0 : i32
    %2 = arith.cmpi ne, %1, %c0_i32_0 : i32
    scf.if %2 {
      %c0_21 = arith.constant 0 : index
      %c0_22 = arith.constant 0 : index
      %c0_23 = arith.constant 0 : index
      %23 = vector.load %arg3[%c0_21, %c0_22, %c0_23] : memref<1x16x32xf32, #tpu.memory_space<vmem>>, vector<1x16x32xf32>
      %24 = vector.shape_cast %23 : vector<1x16x32xf32> to vector<16x32xf32>
      %c0_i32_24 = arith.constant 0 : i32
      %c4_i32_25 = arith.constant 4 : i32
      %25 = arith.addi %c0_i32_24, %c4_i32_25 : i32
      %c1_i32_26 = arith.constant 1 : i32
      scf.for %arg16 = %c0_i32_24 to %25 step %c1_i32_26  : i32 {
        %26 = arith.index_cast %arg16 : i32 to index
        %c0_28 = arith.constant 0 : index
        %c0_29 = arith.constant 0 : index
        %27 = vector.load %arg6[%26, %c0_28, %c0_29] : memref<4x32x8xf32, #tpu.memory_space<vmem>>, vector<1x32x8xf32>
        %28 = vector.shape_cast %27 : vector<1x32x8xf32> to vector<32x8xf32>
        %cst_30 = arith.constant dense<0.000000e+00> : vector<16x8xf32>
        %29 = tpu.matmul %24, %28, %cst_30 {dimension_numbers = #tpu.dot_dimension_numbers<[1], [0], [0], [1], [0, 0, 1, 1], [], []>} : vector<16x32xf32>, vector<32x8xf32>, vector<16x8xf32> -> vector<16x8xf32>
        %30 = arith.index_cast %arg16 : i32 to index
        %c0_31 = arith.constant 0 : index
        %c0_32 = arith.constant 0 : index
        %31 = vector.load %arg7[%30, %c0_31, %c0_32] : memref<4x1x8xf32, #tpu.memory_space<vmem>>, vector<1x1x8xf32>
        %32 = vector.shape_cast %31 : vector<1x1x8xf32> to vector<1x8xf32>
        %33 = vector.broadcast %32 : vector<1x8xf32> to vector<16x8xf32>
        %34 = arith.addf %29, %33 : vector<16x8xf32>
        %35 = arith.index_cast %arg16 : i32 to index
        %c0_33 = arith.constant 0 : index
        %c0_34 = arith.constant 0 : index
        %36 = vector.load %arg8[%35, %c0_33, %c0_34] : memref<4x32x8xf32, #tpu.memory_space<vmem>>, vector<1x32x8xf32>
        %37 = vector.shape_cast %36 : vector<1x32x8xf32> to vector<32x8xf32>
        %cst_35 = arith.constant dense<0.000000e+00> : vector<16x8xf32>
        %38 = tpu.matmul %24, %37, %cst_35 {dimension_numbers = #tpu.dot_dimension_numbers<[1], [0], [0], [1], [0, 0, 1, 1], [], []>} : vector<16x32xf32>, vector<32x8xf32>, vector<16x8xf32> -> vector<16x8xf32>
        %39 = arith.index_cast %arg16 : i32 to index
        %c0_36 = arith.constant 0 : index
        %c0_37 = arith.constant 0 : index
        %40 = vector.load %arg9[%39, %c0_36, %c0_37] : memref<4x1x8xf32, #tpu.memory_space<vmem>>, vector<1x1x8xf32>
        %41 = vector.shape_cast %40 : vector<1x1x8xf32> to vector<1x8xf32>
        %42 = vector.broadcast %41 : vector<1x8xf32> to vector<16x8xf32>
        %43 = arith.addf %38, %42 : vector<16x8xf32>
        %44 = arith.index_cast %arg16 : i32 to index
        %c0_38 = arith.constant 0 : index
        %c0_39 = arith.constant 0 : index
        %45 = vector.load %arg13[%44, %c0_38, %c0_39] : memref<4x16x8xf32, #tpu.memory_space<vmem>>, vector<1x16x8xf32>
        %46 = vector.shape_cast %45 : vector<1x16x8xf32> to vector<16x8xf32>
        %47 = vector.shape_cast %34 : vector<16x8xf32> to vector<1x16x8xf32>
        tpu.vector_store %arg13[%44, %c0_38, %c0_39], %47 {strides = array<i32>} : memref<4x16x8xf32, #tpu.memory_space<vmem>>, vector<1x16x8xf32>,
        %48 = arith.index_cast %arg16 : i32 to index
        %c0_40 = arith.constant 0 : index
        %c0_41 = arith.constant 0 : index
        %49 = vector.load %arg14[%48, %c0_40, %c0_41] : memref<4x16x8xf32, #tpu.memory_space<vmem>>, vector<1x16x8xf32>
        %50 = vector.shape_cast %49 : vector<1x16x8xf32> to vector<16x8xf32>
        %51 = vector.shape_cast %43 : vector<16x8xf32> to vector<1x16x8xf32>
        tpu.vector_store %arg14[%48, %c0_40, %c0_41], %51 {strides = array<i32>} : memref<4x16x8xf32, #tpu.memory_space<vmem>>, vector<1x16x8xf32>,
      }
      %c4_i32_27 = arith.constant 4 : i32
    } else {
    }
    %c0 = arith.constant 0 : index
    %c0_1 = arith.constant 0 : index
    %c0_2 = arith.constant 0 : index
    %3 = vector.load %arg2[%c0, %c0_1, %c0_2] : memref<1x8x32xf32, #tpu.memory_space<vmem>>, vector<1x8x32xf32>
    %4 = vector.shape_cast %3 : vector<1x8x32xf32> to vector<8x32xf32>
    %c0_i32_3 = arith.constant 0 : i32
    %c4_i32 = arith.constant 4 : i32
    %5 = arith.addi %c0_i32_3, %c4_i32 : i32
    %c1_i32 = arith.constant 1 : i32
    scf.for %arg16 = %c0_i32_3 to %5 step %c1_i32  : i32 {
      %23 = arith.index_cast %arg16 : i32 to index
      %c0_21 = arith.constant 0 : index
      %c0_22 = arith.constant 0 : index
      %24 = vector.load %arg4[%23, %c0_21, %c0_22] : memref<4x32x8xf32, #tpu.memory_space<vmem>>, vector<1x32x8xf32>
      %25 = vector.shape_cast %24 : vector<1x32x8xf32> to vector<32x8xf32>
      %cst_23 = arith.constant dense<0.000000e+00> : vector<8x8xf32>
      %26 = tpu.matmul %4, %25, %cst_23 {dimension_numbers = #tpu.dot_dimension_numbers<[1], [0], [0], [1], [0, 0, 1, 1], [], []>} : vector<8x32xf32>, vector<32x8xf32>, vector<8x8xf32> -> vector<8x8xf32>
      %27 = arith.index_cast %arg16 : i32 to index
      %c0_24 = arith.constant 0 : index
      %c0_25 = arith.constant 0 : index
      %28 = vector.load %arg5[%27, %c0_24, %c0_25] : memref<4x1x8xf32, #tpu.memory_space<vmem>>, vector<1x1x8xf32>
      %29 = vector.shape_cast %28 : vector<1x1x8xf32> to vector<1x8xf32>
      %30 = vector.broadcast %29 : vector<1x8xf32> to vector<8x8xf32>
      %31 = arith.addf %26, %30 : vector<8x8xf32>
      %32 = arith.index_cast %arg16 : i32 to index
      %c0_26 = arith.constant 0 : index
      %c0_27 = arith.constant 0 : index
      %33 = vector.load %arg13[%32, %c0_26, %c0_27] : memref<4x16x8xf32, #tpu.memory_space<vmem>>, vector<1x16x8xf32>
      %34 = vector.shape_cast %33 : vector<1x16x8xf32> to vector<16x8xf32>
      %cst_28 = arith.constant dense<0.000000e+00> : vector<8x16xf32>
      %35 = tpu.matmul %31, %34, %cst_28 {dimension_numbers = #tpu.dot_dimension_numbers<[1], [1], [0], [0], [0, 0, 1, 0], [], []>} : vector<8x8xf32>, vector<16x8xf32>, vector<8x16xf32> -> vector<8x16xf32>
      %cst_29 = arith.constant dense<0xFF800000> : vector<8xf32>
      %36 = vector.multi_reduction <maximumf>, %35, %cst_29 [1] : vector<8x16xf32> to vector<8xf32>
      %37 = vector.shape_cast %36 : vector<8xf32> to vector<8x1xf32>
      %38 = vector.broadcast %37 : vector<8x1xf32> to vector<8x16xf32>
      %39 = arith.subf %35, %38 : vector<8x16xf32>
      %40 = math.exp %39 : vector<8x16xf32>
      %cst_30 = arith.constant dense<0.000000e+00> : vector<8xf32>
      %41 = vector.multi_reduction <add>, %40, %cst_30 [1] : vector<8x16xf32> to vector<8xf32>
      %42 = vector.shape_cast %41 : vector<8xf32> to vector<8x1xf32>
      %43 = tpu.reciprocal %42 {approx = true} : vector<8x1xf32> -> vector<8x1xf32>
      %44 = vector.broadcast %43 : vector<8x1xf32> to vector<8x16xf32>
      %45 = arith.mulf %40, %44 : vector<8x16xf32>
      %46 = arith.index_cast %arg16 : i32 to index
      %c0_31 = arith.constant 0 : index
      %c0_32 = arith.constant 0 : index
      %47 = vector.load %arg14[%46, %c0_31, %c0_32] : memref<4x16x8xf32, #tpu.memory_space<vmem>>, vector<1x16x8xf32>
      %48 = vector.shape_cast %47 : vector<1x16x8xf32> to vector<16x8xf32>
      %cst_33 = arith.constant dense<0.000000e+00> : vector<8x8xf32>
      %49 = tpu.matmul %45, %48, %cst_33 {dimension_numbers = #tpu.dot_dimension_numbers<[1], [0], [0], [1], [0, 0, 1, 1], [], []>} : vector<8x16xf32>, vector<16x8xf32>, vector<8x8xf32> -> vector<8x8xf32>
      %50 = arith.index_cast %arg16 : i32 to index
      %c0_34 = arith.constant 0 : index
      %c0_35 = arith.constant 0 : index
      %51 = vector.load %arg15[%50, %c0_34, %c0_35] : memref<4x8x8xf32, #tpu.memory_space<vmem>>, vector<1x8x8xf32>
      %52 = vector.shape_cast %51 : vector<1x8x8xf32> to vector<8x8xf32>
      %53 = vector.shape_cast %49 : vector<8x8xf32> to vector<1x8x8xf32>
      tpu.vector_store %arg15[%50, %c0_34, %c0_35], %53 {strides = array<i32>} : memref<4x8x8xf32, #tpu.memory_space<vmem>>, vector<1x8x8xf32>,
    }
    %c4_i32_4 = arith.constant 4 : i32
    %c0_5 = arith.constant 0 : index
    %c0_6 = arith.constant 0 : index
    %c0_7 = arith.constant 0 : index
    %6 = vector.load %arg15[%c0_5, %c0_6, %c0_7] : memref<4x8x8xf32, #tpu.memory_space<vmem>>, vector<1x8x8xf32>
    %7 = vector.shape_cast %6 : vector<1x8x8xf32> to vector<8x8xf32>
    %c1 = arith.constant 1 : index
    %c0_8 = arith.constant 0 : index
    %c0_9 = arith.constant 0 : index
    %8 = vector.load %arg15[%c1, %c0_8, %c0_9] : memref<4x8x8xf32, #tpu.memory_space<vmem>>, vector<1x8x8xf32>
    %9 = vector.shape_cast %8 : vector<1x8x8xf32> to vector<8x8xf32>
    %c2 = arith.constant 2 : index
    %c0_10 = arith.constant 0 : index
    %c0_11 = arith.constant 0 : index
    %10 = vector.load %arg15[%c2, %c0_10, %c0_11] : memref<4x8x8xf32, #tpu.memory_space<vmem>>, vector<1x8x8xf32>
    %11 = vector.shape_cast %10 : vector<1x8x8xf32> to vector<8x8xf32>
    %c3 = arith.constant 3 : index
    %c0_12 = arith.constant 0 : index
    %c0_13 = arith.constant 0 : index
    %12 = vector.load %arg15[%c3, %c0_12, %c0_13] : memref<4x8x8xf32, #tpu.memory_space<vmem>>, vector<1x8x8xf32>
    %13 = vector.shape_cast %12 : vector<1x8x8xf32> to vector<8x8xf32>
    %14 = tpu.concatenate %7, %9, %11, %13 in 1 : vector<8x8xf32>, vector<8x8xf32>, vector<8x8xf32>, vector<8x8xf32> -> vector<8x32xf32>
    %c0_14 = arith.constant 0 : index
    %c0_15 = arith.constant 0 : index
    %15 = vector.load %arg10[%c0_14, %c0_15] : memref<32x32xf32, #tpu.memory_space<vmem>>, vector<32x32xf32>
    %cst = arith.constant dense<0.000000e+00> : vector<8x32xf32>
    %16 = tpu.matmul %14, %15, %cst {dimension_numbers = #tpu.dot_dimension_numbers<[1], [0], [0], [1], [0, 0, 1, 1], [], []>} : vector<8x32xf32>, vector<32x32xf32>, vector<8x32xf32> -> vector<8x32xf32>
    %c0_16 = arith.constant 0 : index
    %c0_17 = arith.constant 0 : index
    %17 = vector.load %arg11[%c0_16, %c0_17] : memref<1x32xf32, #tpu.memory_space<vmem>>, vector<1x32xf32>
    %18 = vector.broadcast %17 : vector<1x32xf32> to vector<8x32xf32>
    %19 = arith.addf %16, %18 : vector<8x32xf32>
    %c0_18 = arith.constant 0 : index
    %c0_19 = arith.constant 0 : index
    %c0_20 = arith.constant 0 : index
    %20 = vector.load %arg12[%c0_18, %c0_19, %c0_20] : memref<1x8x32xf32, #tpu.memory_space<vmem>>, vector<1x8x32xf32>
    %21 = vector.shape_cast %20 : vector<1x8x32xf32> to vector<8x32xf32>
    %22 = vector.shape_cast %19 : vector<8x32xf32> to vector<1x8x32xf32>
    tpu.vector_store %arg12[%c0_18, %c0_19, %c0_20], %22 {strides = array<i32>} : memref<1x8x32xf32, #tpu.memory_space<vmem>>, vector<1x8x32xf32>,
    return
  }
  func.func @transform_0(%arg0: i32, %arg1: i32) -> (i32, i32, i32) {
    %c0_i32 = arith.constant 0 : i32
    %c0_i32_0 = arith.constant 0 : i32
    return %arg0, %arg1, %c0_i32 : i32, i32, i32
  }
  func.func @transform_1(%arg0: i32, %arg1: i32) -> (i32, i32, i32) {
    %c0_i32 = arith.constant 0 : i32
    %c0_i32_0 = arith.constant 0 : i32
    %c0_i32_1 = arith.constant 0 : i32
    return %arg0, %c0_i32, %c0_i32_0 : i32, i32, i32
  }
  func.func @transform_2(%arg0: i32, %arg1: i32) -> (i32, i32, i32) {
    %c0_i32 = arith.constant 0 : i32
    %c0_i32_0 = arith.constant 0 : i32
    %c0_i32_1 = arith.constant 0 : i32
    %c0_i32_2 = arith.constant 0 : i32
    return %c0_i32, %c0_i32_0, %c0_i32_1 : i32, i32, i32
  }
  func.func @transform_3(%arg0: i32, %arg1: i32) -> (i32, i32, i32) {
    %c0_i32 = arith.constant 0 : i32
    %c0_i32_0 = arith.constant 0 : i32
    %c0_i32_1 = arith.constant 0 : i32
    %c0_i32_2 = arith.constant 0 : i32
    return %c0_i32, %c0_i32_0, %c0_i32_1 : i32, i32, i32
  }
  func.func @transform_4(%arg0: i32, %arg1: i32) -> (i32, i32, i32) {
    %c0_i32 = arith.constant 0 : i32
    %c0_i32_0 = arith.constant 0 : i32
    %c0_i32_1 = arith.constant 0 : i32
    %c0_i32_2 = arith.constant 0 : i32
    return %c0_i32, %c0_i32_0, %c0_i32_1 : i32, i32, i32
  }
  func.func @transform_5(%arg0: i32, %arg1: i32) -> (i32, i32, i32) {
    %c0_i32 = arith.constant 0 : i32
    %c0_i32_0 = arith.constant 0 : i32
    %c0_i32_1 = arith.constant 0 : i32
    %c0_i32_2 = arith.constant 0 : i32
    return %c0_i32, %c0_i32_0, %c0_i32_1 : i32, i32, i32
  }
  func.func @transform_6(%arg0: i32, %arg1: i32) -> (i32, i32, i32) {
    %c0_i32 = arith.constant 0 : i32
    %c0_i32_0 = arith.constant 0 : i32
    %c0_i32_1 = arith.constant 0 : i32
    %c0_i32_2 = arith.constant 0 : i32
    return %c0_i32, %c0_i32_0, %c0_i32_1 : i32, i32, i32
  }
  func.func @transform_7(%arg0: i32, %arg1: i32) -> (i32, i32, i32) {
    %c0_i32 = arith.constant 0 : i32
    %c0_i32_0 = arith.constant 0 : i32
    %c0_i32_1 = arith.constant 0 : i32
    %c0_i32_2 = arith.constant 0 : i32
    return %c0_i32, %c0_i32_0, %c0_i32_1 : i32, i32, i32
  }
  func.func @transform_8(%arg0: i32, %arg1: i32) -> (i32, i32) {
    %c0_i32 = arith.constant 0 : i32
    %c0_i32_0 = arith.constant 0 : i32
    %c0_i32_1 = arith.constant 0 : i32
    return %c0_i32, %c0_i32_0 : i32, i32
  }
  func.func @transform_9(%arg0: i32, %arg1: i32) -> (i32, i32) {
    %c0_i32 = arith.constant 0 : i32
    %c0_i32_0 = arith.constant 0 : i32
    %c0_i32_1 = arith.constant 0 : i32
    return %c0_i32, %c0_i32_0 : i32, i32
  }
  func.func @transform_10(%arg0: i32, %arg1: i32) -> (i32, i32, i32) {
    %c0_i32 = arith.constant 0 : i32
    %c0_i32_0 = arith.constant 0 : i32
    return %arg0, %arg1, %c0_i32 : i32, i32, i32
  }
}

</mosaic_0001>

<llo_original>
// kernel: tpu_custom_call.1
$region0: #{tpu_custom_call.1}
  #allocation0 [shape = 'u32[]', space=smem, size = 0x4, offset = 0x4, fixed_abs, tag = 'smem constant byte address 0x4 - core index']
  #allocation1 [shape = 'u32[72,128]{1,0:T(1,128)}', space=vmem, size = 0x9000, scoped, tag = 'internal scratch']
  #allocation2 [shape = 'f32[4,16,8]{2,1,0:T(8,128)}', space=vmem, size = 0x8000, scoped, tag = 'scratch operand']
  #allocation3 [shape = 'f32[4,16,8]{2,1,0:T(8,128)}', space=vmem, size = 0x8000, scoped, tag = 'scratch operand']
  #allocation4 [shape = 'f32[4,8,8]{2,1,0:T(8,128)}', space=vmem, size = 0x4000, scoped, tag = 'scratch operand']
  %s0 = inlined_call_operand.vmem [shape: f32[2,16,32], index: 0, kind: input, shape index: {}]
  %s1 = inlined_call_operand.vmem [shape: f32[2,16,32], index: 1, kind: input, shape index: {}]
  %s2 = inlined_call_operand.vmem [shape: f32[4,32,8], index: 2, kind: input, shape index: {}]
  %s3 = inlined_call_operand.vmem [shape: f32[4,1,8], index: 3, kind: input, shape index: {}]
  %s4 = inlined_call_operand.vmem [shape: f32[4,32,8], index: 4, kind: input, shape index: {}]
  %s5 = inlined_call_operand.vmem [shape: f32[4,1,8], index: 5, kind: input, shape index: {}]
  %s6 = inlined_call_operand.vmem [shape: f32[4,32,8], index: 6, kind: input, shape index: {}]
  %s7 = inlined_call_operand.vmem [shape: f32[4,1,8], index: 7, kind: input, shape index: {}]
  %s8 = inlined_call_operand.vmem [shape: f32[32,32], index: 8, kind: input, shape index: {}]
  %s9 = inlined_call_operand.vmem [shape: f32[1,32], index: 9, kind: input, shape index: {}]
  %s10 = inlined_call_operand.hbm [shape: f32[2,16,32], index: 10, kind: output, shape index: {}]
  %s11 = sld [smem:[#allocation0]]
  $region91: #{tpu_custom_call.1} parent=0
    _
  %s13 = ssub.s32 1, %s11
  %s14 = scalar_select 0, %s13, %s11
  $region1: #{tpu_custom_call.1} parent=0
    #allocation5 [shape = 'u8[8192]{0}', space=vmem, size = 0x2000, scoped, tag = 'output window, operand 0']
    #allocation6 [shape = 's32[2]{0}', space=sflag, size = 0x8, scoped, tag = 'scoped memory for tpu_custom_call.1']
    %15 = vsyncpa [#allocation6], 0
    %s16 = scalar_lea.sflag [#allocation6], 1
    %17 = vsyncpa %s16, 0
    loop: start=0, step=1, limit=6
    $region2: #{tpu_custom_call.1} parent=1 // loop_pre_header
      _
    $region3: #{tpu_custom_call.1} parent=1 // loop_header
      %s19 = sphi 0, %s23
      %p20 = scmp.ge.s32.totalorder %s19, 6
      %s26 = sphi 0, %s38
      %s27 = sphi 0, %s34
      %s28 = sphi 0, %s26
      %s29 = sphi 0, %s27
      %s30 = sphi 0, %s28
      %s31 = sphi 0, %s29
      %s43 = sphi 0, %s45
      %s46 = sphi 0, %s43
      %s47 = sphi 0, %s46
      %s63 = sphi 0, %s47
      %s69 = sphi 0, %s71
      %s72 = sphi 0, %s69
      %s73 = sphi 0, %s72
      %s89 = sphi 0, %s73
      %s93 = sphi 0, %s93
      %s95 = sphi 0, %s93
      %s96 = sphi 0, %s95
      %s110 = sphi 0, %s96
      %s114 = sphi 0, %s114
      %s116 = sphi 0, %s114
      %s117 = sphi 0, %s116
      %s131 = sphi 0, %s117
      %s135 = sphi 0, %s135
      %s137 = sphi 0, %s135
      %s138 = sphi 0, %s137
      %s152 = sphi 0, %s138
      %s156 = sphi 0, %s156
      %s158 = sphi 0, %s156
      %s159 = sphi 0, %s158
      %s173 = sphi 0, %s159
      %s177 = sphi 0, %s177
      %s179 = sphi 0, %s177
      %s180 = sphi 0, %s179
      %s194 = sphi 0, %s180
      %s198 = sphi 0, %s198
      %s200 = sphi 0, %s198
      %s201 = sphi 0, %s200
      %s215 = sphi 0, %s201
      %s219 = sphi 0, %s219
      %s221 = sphi 0, %s219
      %s222 = sphi 0, %s221
      %s236 = sphi 0, %s222
      %s240 = sphi 0, %s240
      %s242 = sphi 0, %s240
      %s243 = sphi 0, %s242
      %s257 = sphi 0, %s243
      %s265 = sphi 0, %s267
      %s268 = sphi 0, %s265
      %s269 = sphi 0, %s268
      %s285 = sphi 0, %s269
    $region4: #{tpu_custom_call.1} parent=1 // loop_header_branch
      %22 = sbr.rel (%p20) target = $region8
    $region5: #{tpu_custom_call.1} parent=1 // loop_body
      %s24 = ssub.s32 %s19, 1
      %s25 = ssub.s32 %s19, 2
      %s32 = sadd.s32 1, %s27
      %p33 = scmp.ge.s32.totalorder %s32, 2
      %s34 = scalar_select %p33, 0, %s32
      %s35 = sadd.s32 1, %s26
      %s36 = scalar_select %p33, %s35, %s26
      %p37 = scmp.ge.s32.totalorder %s36, 2
      %s38 = scalar_select %p37, 0, %s36
      %s39 = ssub.s32 %s26, %s38
      %s40 = ssub.s32 %s27, %s34
      %s41 = sor.u32 %s39, %s40
      %p42 = scmp.eq.s32.totalorder %s41, 0
      %s44 = sadd.s32 %s43, 1
      %s45 = scalar_select %p42, %s43, %s44
      %p48 = pneg %p42
      %p49 = scmp.eq.s32.totalorder %s19, 3
      %p50 = por %p48, %p49
      %p51 = scmp.ne.s32.totalorder %s43, %s46
      %p52 = scmp.eq.s32.totalorder %s19, 0
      %p53 = por %p51, %p52
      %p54 = scmp.ne.s32.totalorder %s43, %s46
      %p55 = scmp.eq.s32.totalorder %s24, 3
      %p56 = por %p54, %p55
      %p57 = scmp.ne.s32.totalorder %s46, %s47
      %p58 = scmp.eq.s32.totalorder %s24, 0
      %p59 = por %p57, %p58
      %p60 = scmp.ne.s32.totalorder %s46, %s47
      %p61 = scmp.eq.s32.totalorder %s25, 3
      %p62 = por %p60, %p61
      %p64 = scmp.ne.s32.totalorder %s47, %s63
      %p65 = scmp.eq.s32.totalorder %s25, 0
      %p66 = por %p64, %p65
      %s67 = ssub.s32 %s26, %s38
      %p68 = scmp.eq.s32.totalorder %s67, 0
      %s70 = sadd.s32 %s69, 1
      %s71 = scalar_select %p68, %s69, %s70
      %p74 = pneg %p68
      %p75 = scmp.eq.s32.totalorder %s19, 3
      %p76 = por %p74, %p75
      %p77 = scmp.ne.s32.totalorder %s69, %s72
      %p78 = scmp.eq.s32.totalorder %s19, 0
      %p79 = por %p77, %p78
      %p80 = scmp.ne.s32.totalorder %s69, %s72
      %p81 = scmp.eq.s32.totalorder %s24, 3
      %p82 = por %p80, %p81
      %p83 = scmp.ne.s32.totalorder %s72, %s73
      %p84 = scmp.eq.s32.totalorder %s24, 0
      %p85 = por %p83, %p84
      %p86 = scmp.ne.s32.totalorder %s72, %s73
      %p87 = scmp.eq.s32.totalorder %s25, 3
      %p88 = por %p86, %p87
      %p90 = scmp.ne.s32.totalorder %s73, %s89
      %p91 = scmp.eq.s32.totalorder %s25, 0
      %p92 = por %p90, %p91
      %s94 = sadd.s32 %s93, 1
      %p97 = scmp.eq.s32.totalorder %s19, 3
      %p98 = scmp.ne.s32.totalorder %s93, %s95
      %p99 = scmp.eq.s32.totalorder %s19, 0
      %p100 = por %p98, %p99
      %p101 = scmp.ne.s32.totalorder %s93, %s95
      %p102 = scmp.eq.s32.totalorder %s24, 3
      %p103 = por %p101, %p102
      %p104 = scmp.ne.s32.totalorder %s95, %s96
      %p105 = scmp.eq.s32.totalorder %s24, 0
      %p106 = por %p104, %p105
      %p107 = scmp.ne.s32.totalorder %s95, %s96
      %p108 = scmp.eq.s32.totalorder %s25, 3
      %p109 = por %p107, %p108
      %p111 = scmp.ne.s32.totalorder %s96, %s110
      %p112 = scmp.eq.s32.totalorder %s25, 0
      %p113 = por %p111, %p112
      %s115 = sadd.s32 %s114, 1
      %p118 = scmp.eq.s32.totalorder %s19, 3
      %p119 = scmp.ne.s32.totalorder %s114, %s116
      %p120 = scmp.eq.s32.totalorder %s19, 0
      %p121 = por %p119, %p120
      %p122 = scmp.ne.s32.totalorder %s114, %s116
      %p123 = scmp.eq.s32.totalorder %s24, 3
      %p124 = por %p122, %p123
      %p125 = scmp.ne.s32.totalorder %s116, %s117
      %p126 = scmp.eq.s32.totalorder %s24, 0
      %p127 = por %p125, %p126
      %p128 = scmp.ne.s32.totalorder %s116, %s117
      %p129 = scmp.eq.s32.totalorder %s25, 3
      %p130 = por %p128, %p129
      %p132 = scmp.ne.s32.totalorder %s117, %s131
      %p133 = scmp.eq.s32.totalorder %s25, 0
      %p134 = por %p132, %p133
      %s136 = sadd.s32 %s135, 1
      %p139 = scmp.eq.s32.totalorder %s19, 3
      %p140 = scmp.ne.s32.totalorder %s135, %s137
      %p141 = scmp.eq.s32.totalorder %s19, 0
      %p142 = por %p140, %p141
      %p143 = scmp.ne.s32.totalorder %s135, %s137
      %p144 = scmp.eq.s32.totalorder %s24, 3
      %p145 = por %p143, %p144
      %p146 = scmp.ne.s32.totalorder %s137, %s138
      %p147 = scmp.eq.s32.totalorder %s24, 0
      %p148 = por %p146, %p147
      %p149 = scmp.ne.s32.totalorder %s137, %s138
      %p150 = scmp.eq.s32.totalorder %s25, 3
      %p151 = por %p149, %p150
      %p153 = scmp.ne.s32.totalorder %s138, %s152
      %p154 = scmp.eq.s32.totalorder %s25, 0
      %p155 = por %p153, %p154
      %s157 = sadd.s32 %s156, 1
      %p160 = scmp.eq.s32.totalorder %s19, 3
      %p161 = scmp.ne.s32.totalorder %s156, %s158
      %p162 = scmp.eq.s32.totalorder %s19, 0
      %p163 = por %p161, %p162
      %p164 = scmp.ne.s32.totalorder %s156, %s158
      %p165 = scmp.eq.s32.totalorder %s24, 3
      %p166 = por %p164, %p165
      %p167 = scmp.ne.s32.totalorder %s158, %s159
      %p168 = scmp.eq.s32.totalorder %s24, 0
      %p169 = por %p167, %p168
      %p170 = scmp.ne.s32.totalorder %s158, %s159
      %p171 = scmp.eq.s32.totalorder %s25, 3
      %p172 = por %p170, %p171
      %p174 = scmp.ne.s32.totalorder %s159, %s173
      %p175 = scmp.eq.s32.totalorder %s25, 0
      %p176 = por %p174, %p175
      %s178 = sadd.s32 %s177, 1
      %p181 = scmp.eq.s32.totalorder %s19, 3
      %p182 = scmp.ne.s32.totalorder %s177, %s179
      %p183 = scmp.eq.s32.totalorder %s19, 0
      %p184 = por %p182, %p183
      %p185 = scmp.ne.s32.totalorder %s177, %s179
      %p186 = scmp.eq.s32.totalorder %s24, 3
      %p187 = por %p185, %p186
      %p188 = scmp.ne.s32.totalorder %s179, %s180
      %p189 = scmp.eq.s32.totalorder %s24, 0
      %p190 = por %p188, %p189
      %p191 = scmp.ne.s32.totalorder %s179, %s180
      %p192 = scmp.eq.s32.totalorder %s25, 3
      %p193 = por %p191, %p192
      %p195 = scmp.ne.s32.totalorder %s180, %s194
      %p196 = scmp.eq.s32.totalorder %s25, 0
      %p197 = por %p195, %p196
      %s199 = sadd.s32 %s198, 1
      %p202 = scmp.eq.s32.totalorder %s19, 3
      %p203 = scmp.ne.s32.totalorder %s198, %s200
      %p204 = scmp.eq.s32.totalorder %s19, 0
      %p205 = por %p203, %p204
      %p206 = scmp.ne.s32.totalorder %s198, %s200
      %p207 = scmp.eq.s32.totalorder %s24, 3
      %p208 = por %p206, %p207
      %p209 = scmp.ne.s32.totalorder %s200, %s201
      %p210 = scmp.eq.s32.totalorder %s24, 0
      %p211 = por %p209, %p210
      %p212 = scmp.ne.s32.totalorder %s200, %s201
      %p213 = scmp.eq.s32.totalorder %s25, 3
      %p214 = por %p212, %p213
      %p216 = scmp.ne.s32.totalorder %s201, %s215
      %p217 = scmp.eq.s32.totalorder %s25, 0
      %p218 = por %p216, %p217
      %s220 = sadd.s32 %s219, 1
      %p223 = scmp.eq.s32.totalorder %s19, 3
      %p224 = scmp.ne.s32.totalorder %s219, %s221
      %p225 = scmp.eq.s32.totalorder %s19, 0
      %p226 = por %p224, %p225
      %p227 = scmp.ne.s32.totalorder %s219, %s221
      %p228 = scmp.eq.s32.totalorder %s24, 3
      %p229 = por %p227, %p228
      %p230 = scmp.ne.s32.totalorder %s221, %s222
      %p231 = scmp.eq.s32.totalorder %s24, 0
      %p232 = por %p230, %p231
      %p233 = scmp.ne.s32.totalorder %s221, %s222
      %p234 = scmp.eq.s32.totalorder %s25, 3
      %p235 = por %p233, %p234
      %p237 = scmp.ne.s32.totalorder %s222, %s236
      %p238 = scmp.eq.s32.totalorder %s25, 0
      %p239 = por %p237, %p238
      %s241 = sadd.s32 %s240, 1
      %p244 = scmp.eq.s32.totalorder %s19, 3
      %p245 = scmp.ne.s32.totalorder %s240, %s242
      %p246 = scmp.eq.s32.totalorder %s19, 0
      %p247 = por %p245, %p246
      %p248 = scmp.ne.s32.totalorder %s240, %s242
      %p249 = scmp.eq.s32.totalorder %s24, 3
      %p250 = por %p248, %p249
      %p251 = scmp.ne.s32.totalorder %s242, %s243
      %p252 = scmp.eq.s32.totalorder %s24, 0
      %p253 = por %p251, %p252
      %p254 = scmp.ne.s32.totalorder %s242, %s243
      %p255 = scmp.eq.s32.totalorder %s25, 3
      %p256 = por %p254, %p255
      %p258 = scmp.ne.s32.totalorder %s243, %s257
      %p259 = scmp.eq.s32.totalorder %s25, 0
      %p260 = por %p258, %p259
      %s261 = ssub.s32 %s26, %s38
      %s262 = ssub.s32 %s27, %s34
      %s263 = sor.u32 %s261, %s262
      %p264 = scmp.eq.s32.totalorder %s263, 0
      %s266 = sadd.s32 %s265, 1
      %s267 = scalar_select %p264, %s265, %s266
      %p270 = pneg %p264
      %p271 = scmp.eq.s32.totalorder %s19, 3
      %p272 = por %p270, %p271
      %p273 = scmp.ne.s32.totalorder %s265, %s268
      %p274 = scmp.eq.s32.totalorder %s19, 0
      %p275 = por %p273, %p274
      %p276 = scmp.ne.s32.totalorder %s265, %s268
      %p277 = scmp.eq.s32.totalorder %s24, 3
      %p278 = por %p276, %p277
      %p279 = scmp.ne.s32.totalorder %s268, %s269
      %p280 = scmp.eq.s32.totalorder %s24, 0
      %p281 = por %p279, %p280
      %p282 = scmp.ne.s32.totalorder %s268, %s269
      %p283 = scmp.eq.s32.totalorder %s25, 3
      %p284 = por %p282, %p283
      %p286 = scmp.ne.s32.totalorder %s269, %s285
      %p287 = scmp.eq.s32.totalorder %s25, 0
      %p288 = por %p286, %p287
      %p289 = scmp.le.s32.totalorder 1, %s19
      %p290 = scmp.lt.s32.totalorder %s19, 5
      %p291 = pnand %p289, %p290
      %p292 = pneg %p291
      // Predicated region
      $region9: #{tpu_custom_call.1} parent=5 // pred_check
        _
      $region10: #{tpu_custom_call.1} parent=5 // pred_check_branch
        %294 = sbr.rel (%p291) target = $region12
      $region11: #{tpu_custom_call.1} parent=5 // pred_region
        %s295 = ssub.s32 %s19, 1
        // Predicated region
        $region13: #{tpu_custom_call.1} parent=11 // pred_check
          %p296 = pneg %p106
        $region14: #{tpu_custom_call.1} parent=11 // pred_check_branch
          %298 = sbr.rel (%p296) target = $region16
        $region15: #{tpu_custom_call.1} parent=11 // pred_region
          _
        $region16: #{tpu_custom_call.1} parent=11 // pred_fallthru
          _
        // Predicated region
        $region17: #{tpu_custom_call.1} parent=11 // pred_check
          %p299 = pneg %p127
        $region18: #{tpu_custom_call.1} parent=11 // pred_check_branch
          %301 = sbr.rel (%p299) target = $region20
        $region19: #{tpu_custom_call.1} parent=11 // pred_region
          _
        $region20: #{tpu_custom_call.1} parent=11 // pred_fallthru
          _
        // Predicated region
        $region21: #{tpu_custom_call.1} parent=11 // pred_check
          %p302 = pneg %p148
        $region22: #{tpu_custom_call.1} parent=11 // pred_check_branch
          %304 = sbr.rel (%p302) target = $region24
        $region23: #{tpu_custom_call.1} parent=11 // pred_region
          _
        $region24: #{tpu_custom_call.1} parent=11 // pred_fallthru
          _
        // Predicated region
        $region25: #{tpu_custom_call.1} parent=11 // pred_check
          %p305 = pneg %p169
        $region26: #{tpu_custom_call.1} parent=11 // pred_check_branch
          %307 = sbr.rel (%p305) target = $region28
        $region27: #{tpu_custom_call.1} parent=11 // pred_region
          _
        $region28: #{tpu_custom_call.1} parent=11 // pred_fallthru
          _
        // Predicated region
        $region29: #{tpu_custom_call.1} parent=11 // pred_check
          %p308 = pneg %p190
        $region30: #{tpu_custom_call.1} parent=11 // pred_check_branch
          %310 = sbr.rel (%p308) target = $region32
        $region31: #{tpu_custom_call.1} parent=11 // pred_region
          _
        $region32: #{tpu_custom_call.1} parent=11 // pred_fallthru
          _
        // Predicated region
        $region33: #{tpu_custom_call.1} parent=11 // pred_check
          %p311 = pneg %p211
        $region34: #{tpu_custom_call.1} parent=11 // pred_check_branch
          %313 = sbr.rel (%p311) target = $region36
        $region35: #{tpu_custom_call.1} parent=11 // pred_region
          _
        $region36: #{tpu_custom_call.1} parent=11 // pred_fallthru
          _
        // Predicated region
        $region37: #{tpu_custom_call.1} parent=11 // pred_check
          %p314 = pneg %p232
        $region38: #{tpu_custom_call.1} parent=11 // pred_check_branch
          %316 = sbr.rel (%p314) target = $region40
        $region39: #{tpu_custom_call.1} parent=11 // pred_region
          _
        $region40: #{tpu_custom_call.1} parent=11 // pred_fallthru
          _
        // Predicated region
        $region41: #{tpu_custom_call.1} parent=11 // pred_check
          %p317 = pneg %p253
        $region42: #{tpu_custom_call.1} parent=11 // pred_check_branch
          %319 = sbr.rel (%p317) target = $region44
        $region43: #{tpu_custom_call.1} parent=11 // pred_region
          _
        $region44: #{tpu_custom_call.1} parent=11 // pred_fallthru
          _
      $region12: #{tpu_custom_call.1} parent=5 // pred_fallthru
        _
      %p320 = scmp.lt.s32.totalorder %s19, 4
      // Predicated region
      $region45: #{tpu_custom_call.1} parent=5 // pred_check
        %p321 = pneg %p320
      $region46: #{tpu_custom_call.1} parent=5 // pred_check_branch
        %323 = sbr.rel (%p321) target = $region48
      $region47: #{tpu_custom_call.1} parent=5 // pred_region
        // Predicated region
        $region49: #{tpu_custom_call.1} parent=47 // pred_check
          %p324 = pneg %p53
        $region50: #{tpu_custom_call.1} parent=47 // pred_check_branch
          %326 = sbr.rel (%p324) target = $region52
        $region51: #{tpu_custom_call.1} parent=47 // pred_region
          %p327 = scmp.lt.s32.totalorder %s26, 1
          %s328 = scalar_select %p327, %s26, 1
          %p329 = scmp.lt.s32.totalorder %s27, 1
          %s330 = scalar_select %p329, %s27, 1
          %s331 = smul.addr %s328, 2
          %s332 = sadd.s32 %s330, %s331
          %s333 = smul.addr %s332, 8
          %s334 = scalar_lea.vmem %s0, %s333
        $region52: #{tpu_custom_call.1} parent=47 // pred_fallthru
          _
        // Predicated region
        $region53: #{tpu_custom_call.1} parent=47 // pred_check
          %p335 = pneg %p79
        $region54: #{tpu_custom_call.1} parent=47 // pred_check_branch
          %337 = sbr.rel (%p335) target = $region56
        $region55: #{tpu_custom_call.1} parent=47 // pred_region
          %p338 = scmp.lt.s32.totalorder %s26, 1
          %s339 = scalar_select %p338, %s26, 1
          %s340 = smul.addr %s339, 2
          %s341 = smul.addr %s340, 8
          %s342 = scalar_lea.vmem %s1, %s341
        $region56: #{tpu_custom_call.1} parent=47 // pred_fallthru
          _
      $region48: #{tpu_custom_call.1} parent=5 // pred_fallthru
        _
      %p343 = scmp.le.s32.totalorder 1, %s19
      %p344 = scmp.lt.s32.totalorder %s19, 5
      %p345 = pnand %p343, %p344
      %p346 = pneg %p345
      // Predicated region
      $region57: #{tpu_custom_call.1} parent=5 // pred_check
        _
      $region58: #{tpu_custom_call.1} parent=5 // pred_check_branch
        %348 = sbr.rel (%p345) target = $region60
      $region59: #{tpu_custom_call.1} parent=5 // pred_region
        %s349 = ssub.s32 %s19, 1
        %p350 = scmp.lt.s32.totalorder %s28, 1
        %s351 = scalar_select %p350, %s28, 1
        %p352 = scmp.lt.s32.totalorder %s29, 1
        %s353 = scalar_select %p352, %s29, 1
        %s354 = smul.addr %s351, 2
        %s355 = sadd.s32 %s353, %s354
        %s356 = smul.addr %s355, 8
        %s357 = scalar_lea.vmem %s0, %s356
        %p358 = pneg %p59
        %p359 = pneg %p56
        %p360 = scmp.lt.s32.totalorder %s28, 1
        %s361 = scalar_select %p360, %s28, 1
        %s362 = smul.addr %s361, 2
        %s363 = smul.addr %s362, 8
        %s364 = scalar_lea.vmem %s1, %s363
        %p365 = pneg %p85
        %p366 = pneg %p82
        %p367 = pneg %p106
        %p368 = pneg %p103
        %p369 = pneg %p127
        %p370 = pneg %p124
        %p371 = pneg %p148
        %p372 = pneg %p145
        %p373 = pneg %p169
        %p374 = pneg %p166
        %p375 = pneg %p190
        %p376 = pneg %p187
        %p377 = pneg %p211
        %p378 = pneg %p208
        %p379 = pneg %p232
        %p380 = pneg %p229
        %p381 = pneg %p253
        %p382 = pneg %p250
        %p383 = pneg %p281
        %p384 = pneg %p278
        %s385 = sand.u32 %s268, 1
        %s386 = scalar_lea.sflag [#allocation6], %s385
        %s387 = sand.u32 %s268, 1
        %s388 = smul.addr %s387, 8
        %s389 = scalar_lea.vmem [#allocation5], %s388
        %p390 = scmp.lt.s32.totalorder %s28, 1
        %s391 = scalar_select %p390, %s28, 1
        %p392 = scmp.lt.s32.totalorder %s29, 1
        %s393 = scalar_select %p392, %s29, 1
        %s394 = smul.addr %s391, 2
        %s395 = sadd.s32 %s393, %s394
        %s396 = smul.addr %s395, 8
        %s397 = scalar_lea.vmem %s0, %s396
        %p398 = scmp.lt.s32.totalorder %s28, 1
        %s399 = scalar_select %p398, %s28, 1
        %s400 = smul.addr %s399, 2
        %s401 = smul.addr %s400, 8
        %s402 = scalar_lea.vmem %s1, %s401
        %p403 = scmp.eq.s32.totalorder %s29, 0
        // Predicated region
        $region61: #{tpu_custom_call.1} parent=59 // pred_check
          %p404 = pneg %p403
        $region62: #{tpu_custom_call.1} parent=59 // pred_check_branch
          %406 = sbr.rel (%p404) target = $region64
        $region63: #{tpu_custom_call.1} parent=59 // pred_region
          %v407 = vld [vmem:[%s402] sm:$0xff]
          %v408 = vld [vmem:[%s402 + $0x8] sm:$0xff]
          loop: start=0, step=1, limit=4
          $region65: #{tpu_custom_call.1} parent=63 // loop_pre_header
            _
          $region66: #{tpu_custom_call.1} parent=63 // loop_header
            %s410 = sphi 0, %s414
            %p411 = scmp.ge.s32.totalorder %s410, 4
          $region67: #{tpu_custom_call.1} parent=63 // loop_header_branch
            %413 = sbr.rel (%p411) target = $region71
          $region68: #{tpu_custom_call.1} parent=63 // loop_body
            %s415 = smul.u32 %s410, 32
            %s416 = scalar_lea.vmem %s4, %s415
            %v417 = vld [vmem:[%s416] sm:$0xff]
            %v418 = vld [vmem:[%s416 + $0x8] sm:$0xff]
            %v419 = vld [vmem:[%s416 + $0x10] sm:$0xff]
            %v420 = vld [vmem:[%s416 + $0x18] sm:$0xff]
            %s421 = scalar_lea.vmem %s5, %s410
            %v422 = vld [vmem:[%s421] sm:$0x1]
            %v424 = vperm.slane %v422, 0
            %vm426 = vcmask 261120
            %v428 = vsel %vm426, %v407, 0
            %v431 = vsel %vm426, %v408, 0
            %433 = vmatpush.msra.mxu0 0.0
            %434 = vmatpush.msra.mxu0 0.0
            %435 = vmatpush.msra.mxu0 0.0
            %436 = vmatpush.msra.mxu0 0.0
            %437 = vmatpush.msra.mxu0 0.0
            %438 = vmatpush.msra.mxu0 0.0
            %439 = vmatpush.msra.mxu0 0.0
            %440 = vmatpush.msra.mxu0 0.0
            %441 = vmatpush.msra.mxu0 0.0
            %442 = vmatpush.msra.mxu0 0.0
            %443 = vmatpush.msra.mxu0 0.0
            %444 = vmatpush.msra.mxu0 0.0
            %445 = vmatpush.msra.mxu0 %v420
            %446 = vmatpush.msra.mxu0 %v419
            %447 = vmatpush.msra.mxu0 %v418
            %448 = vmatpush.msra.mxu0 %v417
            %449 = vmatmul.f32.gmra.mxu0 %v428
            %v450 = vpop.f32.mrf.mxu0
            %v451 = vadd.f32 %v424, %v450
            %452 = vmatmul.f32.gmra.mxu0 %v431
            %v453 = vpop.f32.mrf.mxu0
            %v454 = vadd.f32 %v424, %v453
            %455 = vdwg.mxu0
            %s456 = scalar_lea.vmem %s6, %s415
            %v457 = vld [vmem:[%s456] sm:$0xff]
            %v458 = vld [vmem:[%s456 + $0x8] sm:$0xff]
            %v459 = vld [vmem:[%s456 + $0x10] sm:$0xff]
            %v460 = vld [vmem:[%s456 + $0x18] sm:$0xff]
            %s461 = scalar_lea.vmem %s7, %s410
            %v462 = vld [vmem:[%s461] sm:$0x1]
            %v464 = vperm.slane %v462, 0
            %466 = vmatpush.msra.mxu0 0.0
            %467 = vmatpush.msra.mxu0 0.0
            %468 = vmatpush.msra.mxu0 0.0
            %469 = vmatpush.msra.mxu0 0.0
            %470 = vmatpush.msra.mxu0 0.0
            %471 = vmatpush.msra.mxu0 0.0
            %472 = vmatpush.msra.mxu0 0.0
            %473 = vmatpush.msra.mxu0 0.0
            %474 = vmatpush.msra.mxu0 0.0
            %475 = vmatpush.msra.mxu0 0.0
            %476 = vmatpush.msra.mxu0 0.0
            %477 = vmatpush.msra.mxu0 0.0
            %478 = vmatpush.msra.mxu0 %v460
            %479 = vmatpush.msra.mxu0 %v459
            %480 = vmatpush.msra.mxu0 %v458
            %481 = vmatpush.msra.mxu0 %v457
            %482 = vmatmul.f32.gmra.mxu0 %v428
            %v483 = vpop.f32.mrf.mxu0
            %v484 = vadd.f32 %v464, %v483
            %485 = vmatmul.f32.gmra.mxu0 %v431
            %v486 = vpop.f32.mrf.mxu0
            %v487 = vadd.f32 %v464, %v486
            %488 = vdwg.mxu0
            %s489 = smul.u32 %s410, 16
            %s490 = scalar_lea.vmem [#allocation2], %s489
            %vm491 = vcmask 64512
            %492 = vst.msk [vmem:[%s490] sm:$0xff] %vm491, %v451
            %493 = vst.msk [vmem:[%s490 + $0x8] sm:$0xff] %vm491, %v454
            %s494 = scalar_lea.vmem [#allocation3], %s489
            %495 = vst.msk [vmem:[%s494] sm:$0xff] %vm491, %v484
            %496 = vst.msk [vmem:[%s494 + $0x8] sm:$0xff] %vm491, %v487
          $region69: #{tpu_custom_call.1} parent=63 // loop_footer
            %s414 = sadd.s32 1, %s410
          $region70: #{tpu_custom_call.1} parent=63 // loop_footer_branch
            %409 = sbr.rel target = $region66
          $region71: #{tpu_custom_call.1} parent=63 // loop_exit
            _
        $region64: #{tpu_custom_call.1} parent=59 // pred_fallthru
          _
        %v497 = vld [vmem:[%s397] sm:$0xff]
        loop: start=0, step=1, limit=4
        $region72: #{tpu_custom_call.1} parent=59 // loop_pre_header
          _
        $region73: #{tpu_custom_call.1} parent=59 // loop_header
          %s499 = sphi 0, %s503
          %p500 = scmp.ge.s32.totalorder %s499, 4
        $region74: #{tpu_custom_call.1} parent=59 // loop_header_branch
          %502 = sbr.rel (%p500) target = $region78
        $region75: #{tpu_custom_call.1} parent=59 // loop_body
          %s504 = smul.u32 %s499, 32
          %s505 = scalar_lea.vmem %s2, %s504
          %v506 = vld [vmem:[%s505] sm:$0xff]
          %v507 = vld [vmem:[%s505 + $0x8] sm:$0xff]
          %v508 = vld [vmem:[%s505 + $0x10] sm:$0xff]
          %v509 = vld [vmem:[%s505 + $0x18] sm:$0xff]
          %s510 = scalar_lea.vmem %s3, %s499
          %v511 = vld [vmem:[%s510] sm:$0x1]
          %v513 = vperm.slane %v511, 0
          %vm515 = vcmask 261120
          %v517 = vsel %vm515, %v497, 0
          %519 = vmatpush.msra.mxu0 0.0
          %520 = vmatpush.msra.mxu0 0.0
          %521 = vmatpush.msra.mxu0 0.0
          %522 = vmatpush.msra.mxu0 0.0
          %523 = vmatpush.msra.mxu0 0.0
          %524 = vmatpush.msra.mxu0 0.0
          %525 = vmatpush.msra.mxu0 0.0
          %526 = vmatpush.msra.mxu0 0.0
          %527 = vmatpush.msra.mxu0 0.0
          %528 = vmatpush.msra.mxu0 0.0
          %529 = vmatpush.msra.mxu0 0.0
          %530 = vmatpush.msra.mxu0 0.0
          %531 = vmatpush.msra.mxu0 %v509
          %532 = vmatpush.msra.mxu0 %v508
          %533 = vmatpush.msra.mxu0 %v507
          %534 = vmatpush.msra.mxu0 %v506
          %535 = vmatmul.f32.gmra.mxu0 %v517
          %v536 = vpop.f32.mrf.mxu0
          %v537 = vadd.f32 %v513, %v536
          %538 = vdwg.mxu0
          %s539 = smul.u32 %s499, 16
          %s540 = scalar_lea.vmem [#allocation2], %s539
          %v541 = vld [vmem:[%s540] sm:$0xff]
          %v542 = vld [vmem:[%s540 + $0x8] sm:$0xff]
          %vm543 = vcmask 64512
          %v545 = vsel %vm543, %v537, 0
          %v548 = vsel %vm543, %v541, 0
          %v551 = vsel %vm543, %v542, 0
          %553 = vmatpush.xpose.msra.mxu0 0.0
          %554 = vmatpush.xpose.msra.mxu0 0.0
          %555 = vmatpush.xpose.msra.mxu0 0.0
          %556 = vmatpush.xpose.msra.mxu0 0.0
          %557 = vmatpush.xpose.msra.mxu0 0.0
          %558 = vmatpush.xpose.msra.mxu0 0.0
          %559 = vmatpush.xpose.msra.mxu0 0.0
          %560 = vmatpush.xpose.msra.mxu0 0.0
          %561 = vmatpush.xpose.msra.mxu0 0.0
          %562 = vmatpush.xpose.msra.mxu0 0.0
          %563 = vmatpush.xpose.msra.mxu0 0.0
          %564 = vmatpush.xpose.msra.mxu0 0.0
          %565 = vmatpush.xpose.msra.mxu0 0.0
          %566 = vmatpush.xpose.msra.mxu0 0.0
          %567 = vmatpush.xpose.msra.mxu0 %v551
          %568 = vmatpush.xpose.msra.mxu0 %v548
          %569 = vmatmul.f32.gmra.mxu0 %v545
          %v570 = vpop.f32.mrf.mxu0
          %v571 = vadd.f32 0.0, %v570
          %572 = vdwg.mxu0
          %vm573 = vcmask 130048
          %v574 = vsel %vm573, %v571, -inf
          %575 = vmax.xlane.f32.xlu0 %v574
          %v576 = vpop.xlane.xlu0 %575
          %v577 = vsub.f32 %v571, %v576
          %v578 = vmul.f32 %v577, 1.442695
          %v579 = vpow.pop %v578
          %v580 = vsel %vm573, %v579, 0.0
          %581 = vadd.xlane.f32.xlu0 %v580
          %v582 = vpop.xlane.xlu0 %581
          %v583 = vrcp.pop %v582
          %v584 = vmul.f32 %v579, %v583
          %s585 = scalar_lea.vmem [#allocation3], %s539
          %v586 = vld [vmem:[%s585] sm:$0xff]
          %v587 = vld [vmem:[%s585 + $0x8] sm:$0xff]
          %v589 = vsel %vm573, %v584, 0
          %591 = vmatpush.msra.mxu0 0.0
          %592 = vmatpush.msra.mxu0 0.0
          %593 = vmatpush.msra.mxu0 0.0
          %594 = vmatpush.msra.mxu0 0.0
          %595 = vmatpush.msra.mxu0 0.0
          %596 = vmatpush.msra.mxu0 0.0
          %597 = vmatpush.msra.mxu0 0.0
          %598 = vmatpush.msra.mxu0 0.0
          %599 = vmatpush.msra.mxu0 0.0
          %600 = vmatpush.msra.mxu0 0.0
          %601 = vmatpush.msra.mxu0 0.0
          %602 = vmatpush.msra.mxu0 0.0
          %603 = vmatpush.msra.mxu0 0.0
          %604 = vmatpush.msra.mxu0 0.0
          %605 = vmatpush.msra.mxu0 %v587
          %606 = vmatpush.msra.mxu0 %v586
          %607 = vmatmul.f32.gmra.mxu0 %v589
          %v608 = vpop.f32.mrf.mxu0
          %v609 = vadd.f32 0.0, %v608
          %610 = vdwg.mxu0
          %s611 = smul.u32 %s499, 8
          %s612 = scalar_lea.vmem [#allocation4], %s611
          %613 = vst.msk [vmem:[%s612] sm:$0xff] %vm543, %v609
        $region76: #{tpu_custom_call.1} parent=59 // loop_footer
          %s503 = sadd.s32 1, %s499
        $region77: #{tpu_custom_call.1} parent=59 // loop_footer_branch
          %498 = sbr.rel target = $region73
        $region78: #{tpu_custom_call.1} parent=59 // loop_exit
          _
        %v614 = vld [vmem:[#allocation4] sm:$0xff]
        %s615 = scalar_lea.vmem [#allocation4], 8
        %v616 = vld [vmem:[%s615] sm:$0xff]
        %s617 = scalar_lea.vmem [#allocation4], 16
        %v618 = vld [vmem:[%s617] sm:$0xff]
        %s619 = scalar_lea.vmem [#allocation4], 24
        %v620 = vld [vmem:[%s619] sm:$0xff]
        %622 = vrot.lane.b32.xlu0 %v616, 8
        %v623 = vpop.permute.xlu0 %622
        %626 = vrot.lane.b32.xlu0 %v618, 16
        %v627 = vpop.permute.xlu0 %626
        %630 = vrot.lane.b32.xlu0 %v620, 24
        %v631 = vpop.permute.xlu0 %630
        %vm633 = vcmask 64512
        %v634 = vsel %vm633, %v614, %v623
        %vm635 = vcmask 130048
        %v636 = vsel %vm635, %v634, %v627
        %vm637 = vcmask 195584
        %v638 = vsel %vm637, %v636, %v631
        %v639 = vld [vmem:[%s8] sm:$0xff]
        %v640 = vld [vmem:[%s8 + $0x8] sm:$0xff]
        %v641 = vld [vmem:[%s8 + $0x10] sm:$0xff]
        %v642 = vld [vmem:[%s8 + $0x18] sm:$0xff]
        %v643 = vld [vmem:[%s9] sm:$0x1]
        %v645 = vperm.slane %v643, 0
        %vm647 = vcmask 261120
        %v649 = vsel %vm647, %v638, 0
        %651 = vmatpush.msra.mxu0 0.0
        %652 = vmatpush.msra.mxu0 0.0
        %653 = vmatpush.msra.mxu0 0.0
        %654 = vmatpush.msra.mxu0 0.0
        %655 = vmatpush.msra.mxu0 0.0
        %656 = vmatpush.msra.mxu0 0.0
        %657 = vmatpush.msra.mxu0 0.0
        %658 = vmatpush.msra.mxu0 0.0
        %659 = vmatpush.msra.mxu0 0.0
        %660 = vmatpush.msra.mxu0 0.0
        %661 = vmatpush.msra.mxu0 0.0
        %662 = vmatpush.msra.mxu0 0.0
        %663 = vmatpush.msra.mxu0 %v642
        %664 = vmatpush.msra.mxu0 %v641
        %665 = vmatpush.msra.mxu0 %v640
        %666 = vmatpush.msra.mxu0 %v639
        %667 = vmatmul.f32.gmra.mxu0 %v649
        %v668 = vpop.f32.mrf.mxu0
        %v669 = vadd.f32 %v645, %v668
        %670 = vdwg.mxu0
        %671 = vst.msk [vmem:[%s389] sm:$0xff] %vm647, %v669
        %s672 = sand.u32 %s268, 1
        %s673 = scalar_lea.sflag [#allocation6], %s672
        %s674 = sand.u32 %s268, 1
        %s675 = smul.addr %s674, 8
        %s676 = scalar_lea.vmem [#allocation5], %s675
        // Predicated region
        $region79: #{tpu_custom_call.1} parent=59 // pred_check
          %p677 = pneg %p278
        $region80: #{tpu_custom_call.1} parent=59 // pred_check_branch
          %679 = sbr.rel (%p677) target = $region82
        $region81: #{tpu_custom_call.1} parent=59 // pred_region
          %681 = vsyncadd %s673, 0
          %s682 = smul.addr %s28, 2
          %s683 = sadd.s32 %s29, %s682
          %s684 = smul.addr %s683, 8
          %s685 = scalar_lea.hbm %s10, %s684
          %s687 = sshll.u32 %s676, 4
          %s688 = int_to_ptr.vmem [resolvable:$true] %s687
          %s689 = sshll.u32 %s685, 4
          %s690 = int_to_ptr.hbm [resolvable:$true] %s689
          %692 = dma.vmem_to_hbm [thread:$0]  %s688, 128, %s690, %s673
        $region82: #{tpu_custom_call.1} parent=59 // pred_fallthru
          _
      $region60: #{tpu_custom_call.1} parent=5 // pred_fallthru
        _
      %p693 = scmp.le.s32.totalorder 2, %s19
      // Predicated region
      $region83: #{tpu_custom_call.1} parent=5 // pred_check
        %p694 = pneg %p693
      $region84: #{tpu_custom_call.1} parent=5 // pred_check_branch
        %696 = sbr.rel (%p694) target = $region86
      $region85: #{tpu_custom_call.1} parent=5 // pred_region
        %s697 = ssub.s32 %s19, 2
        // Predicated region
        $region87: #{tpu_custom_call.1} parent=85 // pred_check
          %p698 = pneg %p284
        $region88: #{tpu_custom_call.1} parent=85 // pred_check_branch
          %700 = sbr.rel (%p698) target = $region90
        $region89: #{tpu_custom_call.1} parent=85 // pred_region
          %s701 = sand.u32 %s269, 1
          %s702 = scalar_lea.sflag [#allocation6], %s701
          %s703 = sand.u32 %s269, 1
          %s704 = smul.addr %s703, 8
          %s705 = scalar_lea.vmem [#allocation5], %s704
          %707 = dma.done %s702, 128
        $region90: #{tpu_custom_call.1} parent=85 // pred_fallthru
          _
      $region86: #{tpu_custom_call.1} parent=5 // pred_fallthru
        _
    $region6: #{tpu_custom_call.1} parent=1 // loop_footer
      %s23 = sadd.s32 1, %s19
    $region7: #{tpu_custom_call.1} parent=1 // loop_footer_branch
      %18 = sbr.rel target = $region3
    $region8: #{tpu_custom_call.1} parent=1 // loop_exit
      _
    %708 = vsyncpa [#allocation6], 1
    %s709 = scalar_lea.sflag [#allocation6], 1
    %710 = vsyncpa %s709, 1

</llo_original>
